<compile_context>
chip_gen: v7x
topology: tpu7x:2x2x1
jax: 0.10.0
libtpu: 0.0.40
codegen_flags: <defaults>
</compile_context>

<pallas_src>
import jax
import jax.numpy as jnp
from jax.experimental import pallas as pl
from jax.experimental.pallas import tpu as pltpu


def _lstm_kernel(x_ref, w_ih_ref, w_hh_ref, b_ref, h_out_ref):
    # x_ref:    (T*Bp, E)  time-major, flattened, batch padded to Bp (multiple of 8)
    # w_ih_ref: (E, 4H)    pre-transposed
    # w_hh_ref: (H, 4H)    pre-transposed
    # b_ref:    (1, 4H)    b_ih + b_hh fused
    # h_out_ref:(Bp, H)    final hidden state (padded rows sliced off by caller)
    Bp, H = h_out_ref.shape
    TB, _ = x_ref.shape
    T = TB // Bp

    # Off the serial path: all T input projections in ONE MXU matmul, bias folded in,
    # then a single relayout to (T, Bp, 4H) so the loop reads whole aligned tiles.
    xw = jnp.dot(x_ref[...], w_ih_ref[...],
                 preferred_element_type=jnp.float32) + b_ref[...]      # (T*Bp, 4H)
    xw = xw.reshape(T, Bp, 4 * H)                                      # sublane-aligned split

    w_hh = w_hh_ref[...]                                               # (H, 4H), loop-invariant

    h = jnp.zeros((Bp, H), jnp.float32)
    c = jnp.zeros((Bp, H), jnp.float32)

    # Fully-unrolled recurrence: one MXU matmul + 3 EUP passes + VPU math per step.
    for t in range(T):
        gates = xw[t] + jnp.dot(h, w_hh,
                                preferred_element_type=jnp.float32)    # (Bp, 4H)

        # Whole-vreg activations (2 EUP passes for all four gates):
        #   sigmoid(x) == 0.5 * tanh(0.5 * x) + 0.5   (exact identity)
        sig_all = 0.5 * jnp.tanh(0.5 * gates) + 0.5                    # i, f, o columns
        tanh_all = jnp.tanh(gates)                                     # g column

        # Gate order follows PyTorch nn.LSTM: [i, f, g, o]; slice activated results.
        i_g = sig_all[:, 0 * H:1 * H]
        f_g = sig_all[:, 1 * H:2 * H]
        g_g = tanh_all[:, 2 * H:3 * H]
        o_g = sig_all[:, 3 * H:4 * H]

        c = f_g * c + i_g * g_g
        h = o_g * jnp.tanh(c)                                          # 3rd EUP pass

    h_out_ref[...] = h.astype(h_out_ref.dtype)


def baseline_predictor_forward(embeddings, w_ih, w_hh, b_ih, b_hh):
    """embeddings: (B, T, E) float32; weights in PyTorch nn.LSTM layout:
    w_ih: (4H, E), w_hh: (4H, H), b_ih/b_hh: (4H,). Returns final hidden h: (B, H)."""
    B, T, E = embeddings.shape
    H = w_hh.shape[1]
    assert E == H, "BaselinePredictor uses hidden_size == embedding_size"

    # Pad batch to a full sublane tile so h/c/gates fill whole (8, 128) vregs.
    Bp = max(8, ((B + 7) // 8) * 8)
    if Bp != B:
        pad = jnp.zeros((Bp - B, T, E), embeddings.dtype)
        emb_p = jnp.concatenate([embeddings, pad], axis=0)
    else:
        emb_p = embeddings

    # Layout plumbing only (fused by XLA): time-major + flatten, pre-transposed
    # weights, fused bias.
    x_flat = jnp.transpose(emb_p, (1, 0, 2)).reshape(T * Bp, E)        # (T*Bp, E)
    w_ih_t = jnp.transpose(w_ih)                                       # (E, 4H)
    w_hh_t = jnp.transpose(w_hh)                                       # (H, 4H)
    bias = (b_ih + b_hh).reshape(1, 4 * H)                             # (1, 4H)

    vmem = pltpu.MemorySpace.VMEM
    h_full = pl.pallas_call(
        _lstm_kernel,
        out_shape=jax.ShapeDtypeStruct((Bp, H), embeddings.dtype),
        in_specs=[
            pl.BlockSpec(memory_space=vmem),   # x_flat
            pl.BlockSpec(memory_space=vmem),   # w_ih_t
            pl.BlockSpec(memory_space=vmem),   # w_hh_t
            pl.BlockSpec(memory_space=vmem),   # bias
        ],
        out_specs=pl.BlockSpec(memory_space=vmem),
    )(x_flat, w_ih_t, w_hh_t, bias)

    return h_full[:B]


def _reference_lstm(embeddings, w_ih, w_hh, b_ih, b_hh):
    """Pure-JAX reference of PyTorch nn.LSTM forward; returns final hidden h (B, H)."""
    B, T, E = embeddings.shape
    H = w_hh.shape[1]

    def step(carry, x_t):
        h, c = carry
        gates = x_t @ w_ih.T + b_ih + h @ w_hh.T + b_hh
        i = jax.nn.sigmoid(gates[:, 0 * H:1 * H])
        f = jax.nn.sigmoid(gates[:, 1 * H:2 * H])
        g = jnp.tanh(gates[:, 2 * H:3 * H])
        o = jax.nn.sigmoid(gates[:, 3 * H:4 * H])
        c_new = f * c + i * g
        h_new = o * jnp.tanh(c_new)
        return (h_new, c_new), None

    h0 = jnp.zeros((B, H), jnp.float32)
    c0 = jnp.zeros((B, H), jnp.float32)
    (h_fin, _), _ = jax.lax.scan(step, (h0, c0), jnp.transpose(embeddings, (1, 0, 2)))
    return h_fin


if __name__ == "__main__":
    B, T, E = 2, 8, 32          # batch=2, seq=8, embedding_size=32 (hidden == embedding)
    H = E

    key = jax.random.PRNGKey(0)
    k_x, k_wi, k_wh, k_bi, k_bh = jax.random.split(key, 5)

    # deterministic synthetic parameters (PyTorch nn.LSTM shapes)
    scale = 1.0 / jnp.sqrt(H)
    embeddings = jax.random.normal(k_x, (B, T, E), jnp.float32)
    w_ih = jax.random.uniform(k_wi, (4 * H, E), jnp.float32, -scale, scale)
    w_hh = jax.random.uniform(k_wh, (4 * H, H), jnp.float32, -scale, scale)
    b_ih = jax.random.uniform(k_bi, (4 * H,), jnp.float32, -scale, scale)
    b_hh = jax.random.uniform(k_bh, (4 * H,), jnp.float32, -scale, scale)

    h_kernel = baseline_predictor_forward(embeddings, w_ih, w_hh, b_ih, b_hh)
    jax.block_until_ready(h_kernel)

    h_ref = _reference_lstm(embeddings, w_ih, w_hh, b_ih, b_hh)
    assert h_kernel.shape == (B, H)
    assert jnp.allclose(h_kernel, h_ref, atol=1e-5, rtol=1e-5), "mismatch vs reference LSTM"

    print("KERNEL_OK")
</pallas_src>

<mosaic_0001>
module attributes {stable_mosaic.version = 11 : i64} {
  func.func @_lstm_kernel(%arg0: memref<64x32xf32, #tpu.memory_space<vmem>>, %arg1: memref<32x128xf32, #tpu.memory_space<vmem>>, %arg2: memref<32x128xf32, #tpu.memory_space<vmem>>, %arg3: memref<1x128xf32, #tpu.memory_space<vmem>>, %arg4: memref<8x32xf32, #tpu.memory_space<vmem>>) attributes {dimension_semantics = [], scalar_prefetch = 0 : i64, scratch_operands = 0 : i64, tpu.core_type = #tpu.core_type<tc>} {
    %c0 = arith.constant 0 : index
    %c0_0 = arith.constant 0 : index
    %0 = vector.load %arg0[%c0, %c0_0] : memref<64x32xf32, #tpu.memory_space<vmem>>, vector<64x32xf32>
    %c0_1 = arith.constant 0 : index
    %c0_2 = arith.constant 0 : index
    %1 = vector.load %arg1[%c0_1, %c0_2] : memref<32x128xf32, #tpu.memory_space<vmem>>, vector<32x128xf32>
    %cst = arith.constant dense<0.000000e+00> : vector<64x128xf32>
    %2 = tpu.matmul %0, %1, %cst {dimension_numbers = #tpu.dot_dimension_numbers<[1], [0], [0], [1], [0, 0, 1, 1], [], []>} : vector<64x32xf32>, vector<32x128xf32>, vector<64x128xf32> -> vector<64x128xf32>
    %c0_3 = arith.constant 0 : index
    %c0_4 = arith.constant 0 : index
    %3 = vector.load %arg3[%c0_3, %c0_4] : memref<1x128xf32, #tpu.memory_space<vmem>>, vector<1x128xf32>
    %4 = vector.broadcast %3 : vector<1x128xf32> to vector<64x128xf32>
    %5 = arith.addf %2, %4 : vector<64x128xf32>
    %6 = vector.shape_cast %5 : vector<64x128xf32> to vector<8x8x128xf32>
    %c0_5 = arith.constant 0 : index
    %c0_6 = arith.constant 0 : index
    %7 = vector.load %arg2[%c0_5, %c0_6] : memref<32x128xf32, #tpu.memory_space<vmem>>, vector<32x128xf32>
    %cst_7 = arith.constant 0.000000e+00 : f32
    %8 = vector.broadcast %cst_7 : f32 to vector<8x32xf32>
    %cst_8 = arith.constant 0.000000e+00 : f32
    %9 = vector.broadcast %cst_8 : f32 to vector<8x32xf32>
    %10 = vector.extract_strided_slice %6 {offsets = [0, 0, 0], sizes = [1, 8, 128], strides = [1, 1, 1]} : vector<8x8x128xf32> to vector<1x8x128xf32>
    %11 = vector.shape_cast %10 : vector<1x8x128xf32> to vector<8x128xf32>
    %cst_9 = arith.constant dense<0.000000e+00> : vector<8x128xf32>
    %12 = tpu.matmul %8, %7, %cst_9 {dimension_numbers = #tpu.dot_dimension_numbers<[1], [0], [0], [1], [0, 0, 1, 1], [], []>} : vector<8x32xf32>, vector<32x128xf32>, vector<8x128xf32> -> vector<8x128xf32>
    %13 = arith.addf %11, %12 : vector<8x128xf32>
    %cst_10 = arith.constant 5.000000e-01 : f32
    %14 = vector.broadcast %cst_10 : f32 to vector<8x128xf32>
    %15 = arith.mulf %14, %13 : vector<8x128xf32>
    %16 = math.tanh %15 : vector<8x128xf32>
    %cst_11 = arith.constant 5.000000e-01 : f32
    %17 = vector.broadcast %cst_11 : f32 to vector<8x128xf32>
    %18 = arith.mulf %17, %16 : vector<8x128xf32>
    %cst_12 = arith.constant 5.000000e-01 : f32
    %19 = vector.broadcast %cst_12 : f32 to vector<8x128xf32>
    %20 = arith.addf %18, %19 : vector<8x128xf32>
    %21 = math.tanh %13 : vector<8x128xf32>
    %22 = vector.extract_strided_slice %20 {offsets = [0, 0], sizes = [8, 32], strides = [1, 1]} : vector<8x128xf32> to vector<8x32xf32>
    %23 = vector.extract_strided_slice %20 {offsets = [0, 32], sizes = [8, 32], strides = [1, 1]} : vector<8x128xf32> to vector<8x32xf32>
    %24 = vector.extract_strided_slice %21 {offsets = [0, 64], sizes = [8, 32], strides = [1, 1]} : vector<8x128xf32> to vector<8x32xf32>
    %25 = vector.extract_strided_slice %20 {offsets = [0, 96], sizes = [8, 32], strides = [1, 1]} : vector<8x128xf32> to vector<8x32xf32>
    %26 = arith.mulf %23, %9 : vector<8x32xf32>
    %27 = arith.mulf %22, %24 : vector<8x32xf32>
    %28 = arith.addf %26, %27 : vector<8x32xf32>
    %29 = math.tanh %28 : vector<8x32xf32>
    %30 = arith.mulf %25, %29 : vector<8x32xf32>
    %31 = vector.extract_strided_slice %6 {offsets = [1, 0, 0], sizes = [1, 8, 128], strides = [1, 1, 1]} : vector<8x8x128xf32> to vector<1x8x128xf32>
    %32 = vector.shape_cast %31 : vector<1x8x128xf32> to vector<8x128xf32>
    %cst_13 = arith.constant dense<0.000000e+00> : vector<8x128xf32>
    %33 = tpu.matmul %30, %7, %cst_13 {dimension_numbers = #tpu.dot_dimension_numbers<[1], [0], [0], [1], [0, 0, 1, 1], [], []>} : vector<8x32xf32>, vector<32x128xf32>, vector<8x128xf32> -> vector<8x128xf32>
    %34 = arith.addf %32, %33 : vector<8x128xf32>
    %cst_14 = arith.constant 5.000000e-01 : f32
    %35 = vector.broadcast %cst_14 : f32 to vector<8x128xf32>
    %36 = arith.mulf %35, %34 : vector<8x128xf32>
    %37 = math.tanh %36 : vector<8x128xf32>
    %cst_15 = arith.constant 5.000000e-01 : f32
    %38 = vector.broadcast %cst_15 : f32 to vector<8x128xf32>
    %39 = arith.mulf %38, %37 : vector<8x128xf32>
    %cst_16 = arith.constant 5.000000e-01 : f32
    %40 = vector.broadcast %cst_16 : f32 to vector<8x128xf32>
    %41 = arith.addf %39, %40 : vector<8x128xf32>
    %42 = math.tanh %34 : vector<8x128xf32>
    %43 = vector.extract_strided_slice %41 {offsets = [0, 0], sizes = [8, 32], strides = [1, 1]} : vector<8x128xf32> to vector<8x32xf32>
    %44 = vector.extract_strided_slice %41 {offsets = [0, 32], sizes = [8, 32], strides = [1, 1]} : vector<8x128xf32> to vector<8x32xf32>
    %45 = vector.extract_strided_slice %42 {offsets = [0, 64], sizes = [8, 32], strides = [1, 1]} : vector<8x128xf32> to vector<8x32xf32>
    %46 = vector.extract_strided_slice %41 {offsets = [0, 96], sizes = [8, 32], strides = [1, 1]} : vector<8x128xf32> to vector<8x32xf32>
    %47 = arith.mulf %44, %28 : vector<8x32xf32>
    %48 = arith.mulf %43, %45 : vector<8x32xf32>
    %49 = arith.addf %47, %48 : vector<8x32xf32>
    %50 = math.tanh %49 : vector<8x32xf32>
    %51 = arith.mulf %46, %50 : vector<8x32xf32>
    %52 = vector.extract_strided_slice %6 {offsets = [2, 0, 0], sizes = [1, 8, 128], strides = [1, 1, 1]} : vector<8x8x128xf32> to vector<1x8x128xf32>
    %53 = vector.shape_cast %52 : vector<1x8x128xf32> to vector<8x128xf32>
    %cst_17 = arith.constant dense<0.000000e+00> : vector<8x128xf32>
    %54 = tpu.matmul %51, %7, %cst_17 {dimension_numbers = #tpu.dot_dimension_numbers<[1], [0], [0], [1], [0, 0, 1, 1], [], []>} : vector<8x32xf32>, vector<32x128xf32>, vector<8x128xf32> -> vector<8x128xf32>
    %55 = arith.addf %53, %54 : vector<8x128xf32>
    %cst_18 = arith.constant 5.000000e-01 : f32
    %56 = vector.broadcast %cst_18 : f32 to vector<8x128xf32>
    %57 = arith.mulf %56, %55 : vector<8x128xf32>
    %58 = math.tanh %57 : vector<8x128xf32>
    %cst_19 = arith.constant 5.000000e-01 : f32
    %59 = vector.broadcast %cst_19 : f32 to vector<8x128xf32>
    %60 = arith.mulf %59, %58 : vector<8x128xf32>
    %cst_20 = arith.constant 5.000000e-01 : f32
    %61 = vector.broadcast %cst_20 : f32 to vector<8x128xf32>
    %62 = arith.addf %60, %61 : vector<8x128xf32>
    %63 = math.tanh %55 : vector<8x128xf32>
    %64 = vector.extract_strided_slice %62 {offsets = [0, 0], sizes = [8, 32], strides = [1, 1]} : vector<8x128xf32> to vector<8x32xf32>
    %65 = vector.extract_strided_slice %62 {offsets = [0, 32], sizes = [8, 32], strides = [1, 1]} : vector<8x128xf32> to vector<8x32xf32>
    %66 = vector.extract_strided_slice %63 {offsets = [0, 64], sizes = [8, 32], strides = [1, 1]} : vector<8x128xf32> to vector<8x32xf32>
    %67 = vector.extract_strided_slice %62 {offsets = [0, 96], sizes = [8, 32], strides = [1, 1]} : vector<8x128xf32> to vector<8x32xf32>
    %68 = arith.mulf %65, %49 : vector<8x32xf32>
    %69 = arith.mulf %64, %66 : vector<8x32xf32>
    %70 = arith.addf %68, %69 : vector<8x32xf32>
    %71 = math.tanh %70 : vector<8x32xf32>
    %72 = arith.mulf %67, %71 : vector<8x32xf32>
    %73 = vector.extract_strided_slice %6 {offsets = [3, 0, 0], sizes = [1, 8, 128], strides = [1, 1, 1]} : vector<8x8x128xf32> to vector<1x8x128xf32>
    %74 = vector.shape_cast %73 : vector<1x8x128xf32> to vector<8x128xf32>
    %cst_21 = arith.constant dense<0.000000e+00> : vector<8x128xf32>
    %75 = tpu.matmul %72, %7, %cst_21 {dimension_numbers = #tpu.dot_dimension_numbers<[1], [0], [0], [1], [0, 0, 1, 1], [], []>} : vector<8x32xf32>, vector<32x128xf32>, vector<8x128xf32> -> vector<8x128xf32>
    %76 = arith.addf %74, %75 : vector<8x128xf32>
    %cst_22 = arith.constant 5.000000e-01 : f32
    %77 = vector.broadcast %cst_22 : f32 to vector<8x128xf32>
    %78 = arith.mulf %77, %76 : vector<8x128xf32>
    %79 = math.tanh %78 : vector<8x128xf32>
    %cst_23 = arith.constant 5.000000e-01 : f32
    %80 = vector.broadcast %cst_23 : f32 to vector<8x128xf32>
    %81 = arith.mulf %80, %79 : vector<8x128xf32>
    %cst_24 = arith.constant 5.000000e-01 : f32
    %82 = vector.broadcast %cst_24 : f32 to vector<8x128xf32>
    %83 = arith.addf %81, %82 : vector<8x128xf32>
    %84 = math.tanh %76 : vector<8x128xf32>
    %85 = vector.extract_strided_slice %83 {offsets = [0, 0], sizes = [8, 32], strides = [1, 1]} : vector<8x128xf32> to vector<8x32xf32>
    %86 = vector.extract_strided_slice %83 {offsets = [0, 32], sizes = [8, 32], strides = [1, 1]} : vector<8x128xf32> to vector<8x32xf32>
    %87 = vector.extract_strided_slice %84 {offsets = [0, 64], sizes = [8, 32], strides = [1, 1]} : vector<8x128xf32> to vector<8x32xf32>
    %88 = vector.extract_strided_slice %83 {offsets = [0, 96], sizes = [8, 32], strides = [1, 1]} : vector<8x128xf32> to vector<8x32xf32>
    %89 = arith.mulf %86, %70 : vector<8x32xf32>
    %90 = arith.mulf %85, %87 : vector<8x32xf32>
    %91 = arith.addf %89, %90 : vector<8x32xf32>
    %92 = math.tanh %91 : vector<8x32xf32>
    %93 = arith.mulf %88, %92 : vector<8x32xf32>
    %94 = vector.extract_strided_slice %6 {offsets = [4, 0, 0], sizes = [1, 8, 128], strides = [1, 1, 1]} : vector<8x8x128xf32> to vector<1x8x128xf32>
    %95 = vector.shape_cast %94 : vector<1x8x128xf32> to vector<8x128xf32>
    %cst_25 = arith.constant dense<0.000000e+00> : vector<8x128xf32>
    %96 = tpu.matmul %93, %7, %cst_25 {dimension_numbers = #tpu.dot_dimension_numbers<[1], [0], [0], [1], [0, 0, 1, 1], [], []>} : vector<8x32xf32>, vector<32x128xf32>, vector<8x128xf32> -> vector<8x128xf32>
    %97 = arith.addf %95, %96 : vector<8x128xf32>
    %cst_26 = arith.constant 5.000000e-01 : f32
    %98 = vector.broadcast %cst_26 : f32 to vector<8x128xf32>
    %99 = arith.mulf %98, %97 : vector<8x128xf32>
    %100 = math.tanh %99 : vector<8x128xf32>
    %cst_27 = arith.constant 5.000000e-01 : f32
    %101 = vector.broadcast %cst_27 : f32 to vector<8x128xf32>
    %102 = arith.mulf %101, %100 : vector<8x128xf32>
    %cst_28 = arith.constant 5.000000e-01 : f32
    %103 = vector.broadcast %cst_28 : f32 to vector<8x128xf32>
    %104 = arith.addf %102, %103 : vector<8x128xf32>
    %105 = math.tanh %97 : vector<8x128xf32>
    %106 = vector.extract_strided_slice %104 {offsets = [0, 0], sizes = [8, 32], strides = [1, 1]} : vector<8x128xf32> to vector<8x32xf32>
    %107 = vector.extract_strided_slice %104 {offsets = [0, 32], sizes = [8, 32], strides = [1, 1]} : vector<8x128xf32> to vector<8x32xf32>
    %108 = vector.extract_strided_slice %105 {offsets = [0, 64], sizes = [8, 32], strides = [1, 1]} : vector<8x128xf32> to vector<8x32xf32>
    %109 = vector.extract_strided_slice %104 {offsets = [0, 96], sizes = [8, 32], strides = [1, 1]} : vector<8x128xf32> to vector<8x32xf32>
    %110 = arith.mulf %107, %91 : vector<8x32xf32>
    %111 = arith.mulf %106, %108 : vector<8x32xf32>
    %112 = arith.addf %110, %111 : vector<8x32xf32>
    %113 = math.tanh %112 : vector<8x32xf32>
    %114 = arith.mulf %109, %113 : vector<8x32xf32>
    %115 = vector.extract_strided_slice %6 {offsets = [5, 0, 0], sizes = [1, 8, 128], strides = [1, 1, 1]} : vector<8x8x128xf32> to vector<1x8x128xf32>
    %116 = vector.shape_cast %115 : vector<1x8x128xf32> to vector<8x128xf32>
    %cst_29 = arith.constant dense<0.000000e+00> : vector<8x128xf32>
    %117 = tpu.matmul %114, %7, %cst_29 {dimension_numbers = #tpu.dot_dimension_numbers<[1], [0], [0], [1], [0, 0, 1, 1], [], []>} : vector<8x32xf32>, vector<32x128xf32>, vector<8x128xf32> -> vector<8x128xf32>
    %118 = arith.addf %116, %117 : vector<8x128xf32>
    %cst_30 = arith.constant 5.000000e-01 : f32
    %119 = vector.broadcast %cst_30 : f32 to vector<8x128xf32>
    %120 = arith.mulf %119, %118 : vector<8x128xf32>
    %121 = math.tanh %120 : vector<8x128xf32>
    %cst_31 = arith.constant 5.000000e-01 : f32
    %122 = vector.broadcast %cst_31 : f32 to vector<8x128xf32>
    %123 = arith.mulf %122, %121 : vector<8x128xf32>
    %cst_32 = arith.constant 5.000000e-01 : f32
    %124 = vector.broadcast %cst_32 : f32 to vector<8x128xf32>
    %125 = arith.addf %123, %124 : vector<8x128xf32>
    %126 = math.tanh %118 : vector<8x128xf32>
    %127 = vector.extract_strided_slice %125 {offsets = [0, 0], sizes = [8, 32], strides = [1, 1]} : vector<8x128xf32> to vector<8x32xf32>
    %128 = vector.extract_strided_slice %125 {offsets = [0, 32], sizes = [8, 32], strides = [1, 1]} : vector<8x128xf32> to vector<8x32xf32>
    %129 = vector.extract_strided_slice %126 {offsets = [0, 64], sizes = [8, 32], strides = [1, 1]} : vector<8x128xf32> to vector<8x32xf32>
    %130 = vector.extract_strided_slice %125 {offsets = [0, 96], sizes = [8, 32], strides = [1, 1]} : vector<8x128xf32> to vector<8x32xf32>
    %131 = arith.mulf %128, %112 : vector<8x32xf32>
    %132 = arith.mulf %127, %129 : vector<8x32xf32>
    %133 = arith.addf %131, %132 : vector<8x32xf32>
    %134 = math.tanh %133 : vector<8x32xf32>
    %135 = arith.mulf %130, %134 : vector<8x32xf32>
    %136 = vector.extract_strided_slice %6 {offsets = [6, 0, 0], sizes = [1, 8, 128], strides = [1, 1, 1]} : vector<8x8x128xf32> to vector<1x8x128xf32>
    %137 = vector.shape_cast %136 : vector<1x8x128xf32> to vector<8x128xf32>
    %cst_33 = arith.constant dense<0.000000e+00> : vector<8x128xf32>
    %138 = tpu.matmul %135, %7, %cst_33 {dimension_numbers = #tpu.dot_dimension_numbers<[1], [0], [0], [1], [0, 0, 1, 1], [], []>} : vector<8x32xf32>, vector<32x128xf32>, vector<8x128xf32> -> vector<8x128xf32>
    %139 = arith.addf %137, %138 : vector<8x128xf32>
    %cst_34 = arith.constant 5.000000e-01 : f32
    %140 = vector.broadcast %cst_34 : f32 to vector<8x128xf32>
    %141 = arith.mulf %140, %139 : vector<8x128xf32>
    %142 = math.tanh %141 : vector<8x128xf32>
    %cst_35 = arith.constant 5.000000e-01 : f32
    %143 = vector.broadcast %cst_35 : f32 to vector<8x128xf32>
    %144 = arith.mulf %143, %142 : vector<8x128xf32>
    %cst_36 = arith.constant 5.000000e-01 : f32
    %145 = vector.broadcast %cst_36 : f32 to vector<8x128xf32>
    %146 = arith.addf %144, %145 : vector<8x128xf32>
    %147 = math.tanh %139 : vector<8x128xf32>
    %148 = vector.extract_strided_slice %146 {offsets = [0, 0], sizes = [8, 32], strides = [1, 1]} : vector<8x128xf32> to vector<8x32xf32>
    %149 = vector.extract_strided_slice %146 {offsets = [0, 32], sizes = [8, 32], strides = [1, 1]} : vector<8x128xf32> to vector<8x32xf32>
    %150 = vector.extract_strided_slice %147 {offsets = [0, 64], sizes = [8, 32], strides = [1, 1]} : vector<8x128xf32> to vector<8x32xf32>
    %151 = vector.extract_strided_slice %146 {offsets = [0, 96], sizes = [8, 32], strides = [1, 1]} : vector<8x128xf32> to vector<8x32xf32>
    %152 = arith.mulf %149, %133 : vector<8x32xf32>
    %153 = arith.mulf %148, %150 : vector<8x32xf32>
    %154 = arith.addf %152, %153 : vector<8x32xf32>
    %155 = math.tanh %154 : vector<8x32xf32>
    %156 = arith.mulf %151, %155 : vector<8x32xf32>
    %157 = vector.extract_strided_slice %6 {offsets = [7, 0, 0], sizes = [1, 8, 128], strides = [1, 1, 1]} : vector<8x8x128xf32> to vector<1x8x128xf32>
    %158 = vector.shape_cast %157 : vector<1x8x128xf32> to vector<8x128xf32>
    %cst_37 = arith.constant dense<0.000000e+00> : vector<8x128xf32>
    %159 = tpu.matmul %156, %7, %cst_37 {dimension_numbers = #tpu.dot_dimension_numbers<[1], [0], [0], [1], [0, 0, 1, 1], [], []>} : vector<8x32xf32>, vector<32x128xf32>, vector<8x128xf32> -> vector<8x128xf32>
    %160 = arith.addf %158, %159 : vector<8x128xf32>
    %cst_38 = arith.constant 5.000000e-01 : f32
    %161 = vector.broadcast %cst_38 : f32 to vector<8x128xf32>
    %162 = arith.mulf %161, %160 : vector<8x128xf32>
    %163 = math.tanh %162 : vector<8x128xf32>
    %cst_39 = arith.constant 5.000000e-01 : f32
    %164 = vector.broadcast %cst_39 : f32 to vector<8x128xf32>
    %165 = arith.mulf %164, %163 : vector<8x128xf32>
    %cst_40 = arith.constant 5.000000e-01 : f32
    %166 = vector.broadcast %cst_40 : f32 to vector<8x128xf32>
    %167 = arith.addf %165, %166 : vector<8x128xf32>
    %168 = math.tanh %160 : vector<8x128xf32>
    %169 = vector.extract_strided_slice %167 {offsets = [0, 0], sizes = [8, 32], strides = [1, 1]} : vector<8x128xf32> to vector<8x32xf32>
    %170 = vector.extract_strided_slice %167 {offsets = [0, 32], sizes = [8, 32], strides = [1, 1]} : vector<8x128xf32> to vector<8x32xf32>
    %171 = vector.extract_strided_slice %168 {offsets = [0, 64], sizes = [8, 32], strides = [1, 1]} : vector<8x128xf32> to vector<8x32xf32>
    %172 = vector.extract_strided_slice %167 {offsets = [0, 96], sizes = [8, 32], strides = [1, 1]} : vector<8x128xf32> to vector<8x32xf32>
    %173 = arith.mulf %170, %154 : vector<8x32xf32>
    %174 = arith.mulf %169, %171 : vector<8x32xf32>
    %175 = arith.addf %173, %174 : vector<8x32xf32>
    %176 = math.tanh %175 : vector<8x32xf32>
    %177 = arith.mulf %172, %176 : vector<8x32xf32>
    %c0_41 = arith.constant 0 : index
    %c0_42 = arith.constant 0 : index
    %178 = vector.load %arg4[%c0_41, %c0_42] : memref<8x32xf32, #tpu.memory_space<vmem>>, vector<8x32xf32>
    tpu.vector_store %arg4[%c0_41, %c0_42], %177 {strides = array<i32>} : memref<8x32xf32, #tpu.memory_space<vmem>>, vector<8x32xf32>,
    return
  }
}

</mosaic_0001>

<llo_original>
// kernel: tpu_custom_call.1
$region0: #{tpu_custom_call.1}
  #allocation0 [shape = 'u32[]', space=smem, size = 0x4, offset = 0x4, fixed_abs, tag = 'smem constant byte address 0x4 - core index']
  #allocation1 [shape = 'u32[144,128]{1,0:T(1,128)}', space=vmem, size = 0x12000, scoped, tag = 'internal scratch']
  %s0 = inlined_call_operand.vmem [shape: f32[64,32], index: 0, kind: input, shape index: {}]
  %s1 = inlined_call_operand.vmem [shape: f32[32,128], index: 1, kind: input, shape index: {}]
  %s2 = inlined_call_operand.vmem [shape: f32[32,128], index: 2, kind: input, shape index: {}]
  %s3 = inlined_call_operand.vmem [shape: f32[1,128], index: 3, kind: input, shape index: {}]
  %s4 = inlined_call_operand.hbm [shape: f32[8,32], index: 4, kind: output, shape index: {}]
  %s5 = sld [smem:[#allocation0]]
  $region26: #{tpu_custom_call.1} parent=0
    _
  %s7 = ssub.s32 1, %s5
  %s8 = scalar_select 0, %s7, %s5
  $region1: #{tpu_custom_call.1} parent=0
    #allocation2 [shape = 'u8[4096]{0}', space=vmem, size = 0x1000, scoped, tag = 'output window, operand 0, single buffered']
    #allocation3 [shape = 's32[1]{0}', space=sflag, size = 0x4, scoped, tag = 'scoped memory for tpu_custom_call.1']
    %9 = vsyncpa [#allocation3], 0
    // Predicated region
    $region2: #{tpu_custom_call.1} parent=1 // pred_check
      _
    $region3: #{tpu_custom_call.1} parent=1 // pred_check_branch
      %11 = sbr.rel (0) target = $region5
    $region4: #{tpu_custom_call.1} parent=1 // pred_region
      _
    $region5: #{tpu_custom_call.1} parent=1 // pred_fallthru
      _
    // Predicated region
    $region6: #{tpu_custom_call.1} parent=1 // pred_check
      _
    $region7: #{tpu_custom_call.1} parent=1 // pred_check_branch
      %13 = sbr.rel (0) target = $region9
    $region8: #{tpu_custom_call.1} parent=1 // pred_region
      _
    $region9: #{tpu_custom_call.1} parent=1 // pred_fallthru
      _
    // Predicated region
    $region10: #{tpu_custom_call.1} parent=1 // pred_check
      _
    $region11: #{tpu_custom_call.1} parent=1 // pred_check_branch
      %15 = sbr.rel (0) target = $region13
    $region12: #{tpu_custom_call.1} parent=1 // pred_region
      _
    $region13: #{tpu_custom_call.1} parent=1 // pred_fallthru
      _
    // Predicated region
    $region14: #{tpu_custom_call.1} parent=1 // pred_check
      _
    $region15: #{tpu_custom_call.1} parent=1 // pred_check_branch
      %17 = sbr.rel (0) target = $region17
    $region16: #{tpu_custom_call.1} parent=1 // pred_region
      _
    $region17: #{tpu_custom_call.1} parent=1 // pred_fallthru
      _
    %v18 = vld [vmem:[%s0] sm:$0xff]
    %v19 = vld [vmem:[%s0 + $0x8] sm:$0xff]
    %v20 = vld [vmem:[%s0 + $0x10] sm:$0xff]
    %v21 = vld [vmem:[%s0 + $0x18] sm:$0xff]
    %v22 = vld [vmem:[%s0 + $0x20] sm:$0xff]
    %v23 = vld [vmem:[%s0 + $0x28] sm:$0xff]
    %v24 = vld [vmem:[%s0 + $0x30] sm:$0xff]
    %v25 = vld [vmem:[%s0 + $0x38] sm:$0xff]
    %v26 = vld [vmem:[%s1] sm:$0xff]
    %v27 = vld [vmem:[%s1 + $0x8] sm:$0xff]
    %v28 = vld [vmem:[%s1 + $0x10] sm:$0xff]
    %v29 = vld [vmem:[%s1 + $0x18] sm:$0xff]
    %v30 = vld [vmem:[%s3] sm:$0x1]
    %v32 = vlaneseq
    %v33 = vshrl.u32 %v32, 7
    %v34 = vsub.s32 0, %v33
    %v35 = vrot.slane %v30, %v34
    %vm37 = vcmask 261120
    %v39 = vsel %vm37, %v18, 0
    %v42 = vsel %vm37, %v19, 0
    %v45 = vsel %vm37, %v20, 0
    %v48 = vsel %vm37, %v21, 0
    %v51 = vsel %vm37, %v22, 0
    %v54 = vsel %vm37, %v23, 0
    %v57 = vsel %vm37, %v24, 0
    %v60 = vsel %vm37, %v25, 0
    %62 = vmatprep.subr.mxu0 0.0
    %63 = vmatpush1.msra.mxu0 %v26
    %64 = vmatprep.subr.mxu0 0.0
    %65 = vmatpush1.msra.mxu0 %v27
    %66 = vmatprep.subr.mxu0 0.0
    %67 = vmatpush1.msra.mxu0 %v28
    %68 = vmatprep.subr.mxu0 0.0
    %69 = vmatpush1.msra.mxu0 %v29
    %70 = vmatprep.subr.mxu0 0.0
    %71 = vmatpush1.msra.mxu0 0.0
    %72 = vmatprep.subr.mxu0 0.0
    %73 = vmatpush1.msra.mxu0 0.0
    %74 = vmatprep.subr.mxu0 0.0
    %75 = vmatpush1.msra.mxu0 0.0
    %76 = vmatprep.subr.mxu0 0.0
    %77 = vmatpush1.msra.mxu0 0.0
    %78 = vmatprep.subr.mxu0 0.0
    %79 = vmatpush1.msra.mxu0 0.0
    %80 = vmatprep.subr.mxu0 0.0
    %81 = vmatpush1.msra.mxu0 0.0
    %82 = vmatprep.subr.mxu0 0.0
    %83 = vmatpush1.msra.mxu0 0.0
    %84 = vmatprep.subr.mxu0 0.0
    %85 = vmatpush1.msra.mxu0 0.0
    %86 = vmatprep.subr.mxu0 0.0
    %87 = vmatpush1.msra.mxu0 0.0
    %88 = vmatprep.subr.mxu0 0.0
    %89 = vmatpush1.msra.mxu0 0.0
    %90 = vmatprep.subr.mxu0 0.0
    %91 = vmatpush1.msra.mxu0 0.0
    %92 = vmatprep.subr.mxu0 0.0
    %93 = vmatpush1.msra.mxu0 0.0
    %94 = vmatprep.subr.mxu0 0.0
    %95 = vmatpush1.msra.mxu0 0.0
    %96 = vmatprep.subr.mxu0 0.0
    %97 = vmatpush1.msra.mxu0 0.0
    %98 = vmatprep.subr.mxu0 0.0
    %99 = vmatpush1.msra.mxu0 0.0
    %100 = vmatprep.subr.mxu0 0.0
    %101 = vmatpush1.msra.mxu0 0.0
    %102 = vmatprep.subr.mxu0 0.0
    %103 = vmatpush1.msra.mxu0 0.0
    %104 = vmatprep.subr.mxu0 0.0
    %105 = vmatpush1.msra.mxu0 0.0
    %106 = vmatprep.subr.mxu0 0.0
    %107 = vmatpush1.msra.mxu0 0.0
    %108 = vmatprep.subr.mxu0 0.0
    %109 = vmatpush1.msra.mxu0 0.0
    %110 = vmatprep.subr.mxu0 0.0
    %111 = vmatpush1.msra.mxu0 0.0
    %112 = vmatprep.subr.mxu0 0.0
    %113 = vmatpush1.msra.mxu0 0.0
    %114 = vmatprep.subr.mxu0 0.0
    %115 = vmatpush1.msra.mxu0 0.0
    %116 = vmatprep.subr.mxu0 0.0
    %117 = vmatpush1.msra.mxu0 0.0
    %118 = vmatprep.subr.mxu0 0.0
    %119 = vmatpush1.msra.mxu0 0.0
    %120 = vmatprep.subr.mxu0 0.0
    %121 = vmatpush1.msra.mxu0 0.0
    %122 = vmatprep.subr.mxu0 0.0
    %123 = vmatpush1.msra.mxu0 0.0
    %124 = vmatprep.subr.mxu0 0.0
    %125 = vmatpush1.msra.mxu0 0.0
    %126 = vmatprep.mubr.f32.mxu0 0.0
    %127 = vmatmul.mubr.f32.gmra.mrb[0].mxu0 %v39
    %v128 = vpop.f32.mrb[0].mxu0
    %v129 = vadd.f32 %v35, %v128
    %v130 = vpop.f32.mrb[0].mxu0
    %131 = vmatprep.mubr.f32.mxu0 0.0
    %132 = vmatmul.mubr.f32.gmra.mrb[0].mxu0 %v42
    %v133 = vpop.f32.mrb[0].mxu0
    %v134 = vadd.f32 %v35, %v133
    %v135 = vpop.f32.mrb[0].mxu0
    %136 = vmatprep.mubr.f32.mxu0 0.0
    %137 = vmatmul.mubr.f32.gmra.mrb[0].mxu0 %v45
    %v138 = vpop.f32.mrb[0].mxu0
    %v139 = vadd.f32 %v35, %v138
    %v140 = vpop.f32.mrb[0].mxu0
    %141 = vmatprep.mubr.f32.mxu0 0.0
    %142 = vmatmul.mubr.f32.gmra.mrb[0].mxu0 %v48
    %v143 = vpop.f32.mrb[0].mxu0
    %v144 = vadd.f32 %v35, %v143
    %v145 = vpop.f32.mrb[0].mxu0
    %146 = vmatprep.mubr.f32.mxu0 0.0
    %147 = vmatmul.mubr.f32.gmra.mrb[0].mxu0 %v51
    %v148 = vpop.f32.mrb[0].mxu0
    %v149 = vadd.f32 %v35, %v148
    %v150 = vpop.f32.mrb[0].mxu0
    %151 = vmatprep.mubr.f32.mxu0 0.0
    %152 = vmatmul.mubr.f32.gmra.mrb[0].mxu0 %v54
    %v153 = vpop.f32.mrb[0].mxu0
    %v154 = vadd.f32 %v35, %v153
    %v155 = vpop.f32.mrb[0].mxu0
    %156 = vmatprep.mubr.f32.mxu0 0.0
    %157 = vmatmul.mubr.f32.gmra.mrb[0].mxu0 %v57
    %v158 = vpop.f32.mrb[0].mxu0
    %v159 = vadd.f32 %v35, %v158
    %v160 = vpop.f32.mrb[0].mxu0
    %161 = vmatprep.mubr.f32.mxu0 0.0
    %162 = vmatmul.mubr.f32.gmra.mrb[0].mxu0 %v60
    %v163 = vpop.f32.mrb[0].mxu0
    %v164 = vadd.f32 %v35, %v163
    %v165 = vpop.f32.mrb[0].mxu0
    %166 = vdwg.mxu0
    %v167 = vld [vmem:[%s2] sm:$0xff]
    %v168 = vld [vmem:[%s2 + $0x8] sm:$0xff]
    %v169 = vld [vmem:[%s2 + $0x10] sm:$0xff]
    %v170 = vld [vmem:[%s2 + $0x18] sm:$0xff]
    %v172 = vsel %vm37, 0.0, 0
    %174 = vmatprep.subr.mxu0 0.0
    %175 = vmatpush1.msra.mxu0 %v167
    %176 = vmatprep.subr.mxu0 0.0
    %177 = vmatpush1.msra.mxu0 %v168
    %178 = vmatprep.subr.mxu0 0.0
    %179 = vmatpush1.msra.mxu0 %v169
    %180 = vmatprep.subr.mxu0 0.0
    %181 = vmatpush1.msra.mxu0 %v170
    %182 = vmatprep.subr.mxu0 0.0
    %183 = vmatpush1.msra.mxu0 0.0
    %184 = vmatprep.subr.mxu0 0.0
    %185 = vmatpush1.msra.mxu0 0.0
    %186 = vmatprep.subr.mxu0 0.0
    %187 = vmatpush1.msra.mxu0 0.0
    %188 = vmatprep.subr.mxu0 0.0
    %189 = vmatpush1.msra.mxu0 0.0
    %190 = vmatprep.subr.mxu0 0.0
    %191 = vmatpush1.msra.mxu0 0.0
    %192 = vmatprep.subr.mxu0 0.0
    %193 = vmatpush1.msra.mxu0 0.0
    %194 = vmatprep.subr.mxu0 0.0
    %195 = vmatpush1.msra.mxu0 0.0
    %196 = vmatprep.subr.mxu0 0.0
    %197 = vmatpush1.msra.mxu0 0.0
    %198 = vmatprep.subr.mxu0 0.0
    %199 = vmatpush1.msra.mxu0 0.0
    %200 = vmatprep.subr.mxu0 0.0
    %201 = vmatpush1.msra.mxu0 0.0
    %202 = vmatprep.subr.mxu0 0.0
    %203 = vmatpush1.msra.mxu0 0.0
    %204 = vmatprep.subr.mxu0 0.0
    %205 = vmatpush1.msra.mxu0 0.0
    %206 = vmatprep.subr.mxu0 0.0
    %207 = vmatpush1.msra.mxu0 0.0
    %208 = vmatprep.subr.mxu0 0.0
    %209 = vmatpush1.msra.mxu0 0.0
    %210 = vmatprep.subr.mxu0 0.0
    %211 = vmatpush1.msra.mxu0 0.0
    %212 = vmatprep.subr.mxu0 0.0
    %213 = vmatpush1.msra.mxu0 0.0
    %214 = vmatprep.subr.mxu0 0.0
    %215 = vmatpush1.msra.mxu0 0.0
    %216 = vmatprep.subr.mxu0 0.0
    %217 = vmatpush1.msra.mxu0 0.0
    %218 = vmatprep.subr.mxu0 0.0
    %219 = vmatpush1.msra.mxu0 0.0
    %220 = vmatprep.subr.mxu0 0.0
    %221 = vmatpush1.msra.mxu0 0.0
    %222 = vmatprep.subr.mxu0 0.0
    %223 = vmatpush1.msra.mxu0 0.0
    %224 = vmatprep.subr.mxu0 0.0
    %225 = vmatpush1.msra.mxu0 0.0
    %226 = vmatprep.subr.mxu0 0.0
    %227 = vmatpush1.msra.mxu0 0.0
    %228 = vmatprep.subr.mxu0 0.0
    %229 = vmatpush1.msra.mxu0 0.0
    %230 = vmatprep.subr.mxu0 0.0
    %231 = vmatpush1.msra.mxu0 0.0
    %232 = vmatprep.subr.mxu0 0.0
    %233 = vmatpush1.msra.mxu0 0.0
    %234 = vmatprep.subr.mxu0 0.0
    %235 = vmatpush1.msra.mxu0 0.0
    %236 = vmatprep.subr.mxu0 0.0
    %237 = vmatpush1.msra.mxu0 0.0
    %238 = vmatprep.mubr.f32.mxu0 0.0
    %239 = vmatmul.mubr.f32.gmra.mrb[0].mxu0 %v172
    %v240 = vpop.f32.mrb[0].mxu0
    %v241 = vadd.f32 0.0, %v240
    %v242 = vpop.f32.mrb[0].mxu0
    %243 = vdwg.mxu0
    %v244 = vadd.f32 %v129, %v241
    %v245 = vmul.f32 %v244, 0.5
    %v246 = vtanh.pop %v245
    %v247 = vmul.f32 %v246, 0.5
    %v248 = vadd.f32 %v247, 0.5
    %v249 = vtanh.pop %v244
    %v250 = vmul.f32 %v248, 0.0
    %252 = vrot.lane.b32.xlu0 %v249, 64
    %v253 = vpop.permute.xlu0 %252
    %v255 = vmul.f32 %v248, %v253
    %257 = vrot.lane.b32.xlu0 %v255, 32
    %v258 = vpop.permute.xlu0 %257
    %v260 = vadd.f32 %v250, %v258
    %v261 = vtanh.pop %v260
    %263 = vrot.lane.b32.xlu0 %v261, 64
    %v264 = vpop.permute.xlu0 %263
    %v266 = vmul.f32 %v248, %v264
    %268 = vrot.lane.b32.xlu0 %v266, 32
    %v269 = vpop.permute.xlu0 %268
    %v270 = vsel %vm37, %v269, 0
    %272 = vmatprep.subr.mxu0 0.0
    %273 = vmatpush1.msra.mxu0 %v167
    %274 = vmatprep.subr.mxu0 0.0
    %275 = vmatpush1.msra.mxu0 %v168
    %276 = vmatprep.subr.mxu0 0.0
    %277 = vmatpush1.msra.mxu0 %v169
    %278 = vmatprep.subr.mxu0 0.0
    %279 = vmatpush1.msra.mxu0 %v170
    %280 = vmatprep.subr.mxu0 0.0
    %281 = vmatpush1.msra.mxu0 0.0
    %282 = vmatprep.subr.mxu0 0.0
    %283 = vmatpush1.msra.mxu0 0.0
    %284 = vmatprep.subr.mxu0 0.0
    %285 = vmatpush1.msra.mxu0 0.0
    %286 = vmatprep.subr.mxu0 0.0
    %287 = vmatpush1.msra.mxu0 0.0
    %288 = vmatprep.subr.mxu0 0.0
    %289 = vmatpush1.msra.mxu0 0.0
    %290 = vmatprep.subr.mxu0 0.0
    %291 = vmatpush1.msra.mxu0 0.0
    %292 = vmatprep.subr.mxu0 0.0
    %293 = vmatpush1.msra.mxu0 0.0
    %294 = vmatprep.subr.mxu0 0.0
    %295 = vmatpush1.msra.mxu0 0.0
    %296 = vmatprep.subr.mxu0 0.0
    %297 = vmatpush1.msra.mxu0 0.0
    %298 = vmatprep.subr.mxu0 0.0
    %299 = vmatpush1.msra.mxu0 0.0
    %300 = vmatprep.subr.mxu0 0.0
    %301 = vmatpush1.msra.mxu0 0.0
    %302 = vmatprep.subr.mxu0 0.0
    %303 = vmatpush1.msra.mxu0 0.0
    %304 = vmatprep.subr.mxu0 0.0
    %305 = vmatpush1.msra.mxu0 0.0
    %306 = vmatprep.subr.mxu0 0.0
    %307 = vmatpush1.msra.mxu0 0.0
    %308 = vmatprep.subr.mxu0 0.0
    %309 = vmatpush1.msra.mxu0 0.0
    %310 = vmatprep.subr.mxu0 0.0
    %311 = vmatpush1.msra.mxu0 0.0
    %312 = vmatprep.subr.mxu0 0.0
    %313 = vmatpush1.msra.mxu0 0.0
    %314 = vmatprep.subr.mxu0 0.0
    %315 = vmatpush1.msra.mxu0 0.0
    %316 = vmatprep.subr.mxu0 0.0
    %317 = vmatpush1.msra.mxu0 0.0
    %318 = vmatprep.subr.mxu0 0.0
    %319 = vmatpush1.msra.mxu0 0.0
    %320 = vmatprep.subr.mxu0 0.0
    %321 = vmatpush1.msra.mxu0 0.0
    %322 = vmatprep.subr.mxu0 0.0
    %323 = vmatpush1.msra.mxu0 0.0
    %324 = vmatprep.subr.mxu0 0.0
    %325 = vmatpush1.msra.mxu0 0.0
    %326 = vmatprep.subr.mxu0 0.0
    %327 = vmatpush1.msra.mxu0 0.0
    %328 = vmatprep.subr.mxu0 0.0
    %329 = vmatpush1.msra.mxu0 0.0
    %330 = vmatprep.subr.mxu0 0.0
    %331 = vmatpush1.msra.mxu0 0.0
    %332 = vmatprep.subr.mxu0 0.0
    %333 = vmatpush1.msra.mxu0 0.0
    %334 = vmatprep.subr.mxu0 0.0
    %335 = vmatpush1.msra.mxu0 0.0
    %336 = vmatprep.mubr.f32.mxu0 0.0
    %337 = vmatmul.mubr.f32.gmra.mrb[0].mxu0 %v270
    %v338 = vpop.f32.mrb[0].mxu0
    %v339 = vadd.f32 0.0, %v338
    %v340 = vpop.f32.mrb[0].mxu0
    %341 = vdwg.mxu0
    %v342 = vadd.f32 %v134, %v339
    %v343 = vmul.f32 %v342, 0.5
    %v344 = vtanh.pop %v343
    %v345 = vmul.f32 %v344, 0.5
    %v346 = vadd.f32 %v345, 0.5
    %v347 = vtanh.pop %v342
    %v348 = vmul.f32 %v346, %v260
    %350 = vrot.lane.b32.xlu0 %v347, 64
    %v351 = vpop.permute.xlu0 %350
    %v353 = vmul.f32 %v346, %v351
    %355 = vrot.lane.b32.xlu0 %v353, 32
    %v356 = vpop.permute.xlu0 %355
    %v358 = vadd.f32 %v348, %v356
    %v359 = vtanh.pop %v358
    %361 = vrot.lane.b32.xlu0 %v359, 64
    %v362 = vpop.permute.xlu0 %361
    %v364 = vmul.f32 %v346, %v362
    %366 = vrot.lane.b32.xlu0 %v364, 32
    %v367 = vpop.permute.xlu0 %366
    %v368 = vsel %vm37, %v367, 0
    %370 = vmatprep.subr.mxu0 0.0
    %371 = vmatpush1.msra.mxu0 %v167
    %372 = vmatprep.subr.mxu0 0.0
    %373 = vmatpush1.msra.mxu0 %v168
    %374 = vmatprep.subr.mxu0 0.0
    %375 = vmatpush1.msra.mxu0 %v169
    %376 = vmatprep.subr.mxu0 0.0
    %377 = vmatpush1.msra.mxu0 %v170
    %378 = vmatprep.subr.mxu0 0.0
    %379 = vmatpush1.msra.mxu0 0.0
    %380 = vmatprep.subr.mxu0 0.0
    %381 = vmatpush1.msra.mxu0 0.0
    %382 = vmatprep.subr.mxu0 0.0
    %383 = vmatpush1.msra.mxu0 0.0
    %384 = vmatprep.subr.mxu0 0.0
    %385 = vmatpush1.msra.mxu0 0.0
    %386 = vmatprep.subr.mxu0 0.0
    %387 = vmatpush1.msra.mxu0 0.0
    %388 = vmatprep.subr.mxu0 0.0
    %389 = vmatpush1.msra.mxu0 0.0
    %390 = vmatprep.subr.mxu0 0.0
    %391 = vmatpush1.msra.mxu0 0.0
    %392 = vmatprep.subr.mxu0 0.0
    %393 = vmatpush1.msra.mxu0 0.0
    %394 = vmatprep.subr.mxu0 0.0
    %395 = vmatpush1.msra.mxu0 0.0
    %396 = vmatprep.subr.mxu0 0.0
    %397 = vmatpush1.msra.mxu0 0.0
    %398 = vmatprep.subr.mxu0 0.0
    %399 = vmatpush1.msra.mxu0 0.0
    %400 = vmatprep.subr.mxu0 0.0
    %401 = vmatpush1.msra.mxu0 0.0
    %402 = vmatprep.subr.mxu0 0.0
    %403 = vmatpush1.msra.mxu0 0.0
    %404 = vmatprep.subr.mxu0 0.0
    %405 = vmatpush1.msra.mxu0 0.0
    %406 = vmatprep.subr.mxu0 0.0
    %407 = vmatpush1.msra.mxu0 0.0
    %408 = vmatprep.subr.mxu0 0.0
    %409 = vmatpush1.msra.mxu0 0.0
    %410 = vmatprep.subr.mxu0 0.0
    %411 = vmatpush1.msra.mxu0 0.0
    %412 = vmatprep.subr.mxu0 0.0
    %413 = vmatpush1.msra.mxu0 0.0
    %414 = vmatprep.subr.mxu0 0.0
    %415 = vmatpush1.msra.mxu0 0.0
    %416 = vmatprep.subr.mxu0 0.0
    %417 = vmatpush1.msra.mxu0 0.0
    %418 = vmatprep.subr.mxu0 0.0
    %419 = vmatpush1.msra.mxu0 0.0
    %420 = vmatprep.subr.mxu0 0.0
    %421 = vmatpush1.msra.mxu0 0.0
    %422 = vmatprep.subr.mxu0 0.0
    %423 = vmatpush1.msra.mxu0 0.0
    %424 = vmatprep.subr.mxu0 0.0
    %425 = vmatpush1.msra.mxu0 0.0
    %426 = vmatprep.subr.mxu0 0.0
    %427 = vmatpush1.msra.mxu0 0.0
    %428 = vmatprep.subr.mxu0 0.0
    %429 = vmatpush1.msra.mxu0 0.0
    %430 = vmatprep.subr.mxu0 0.0
    %431 = vmatpush1.msra.mxu0 0.0
    %432 = vmatprep.subr.mxu0 0.0
    %433 = vmatpush1.msra.mxu0 0.0
    %434 = vmatprep.mubr.f32.mxu0 0.0
    %435 = vmatmul.mubr.f32.gmra.mrb[0].mxu0 %v368
    %v436 = vpop.f32.mrb[0].mxu0
    %v437 = vadd.f32 0.0, %v436
    %v438 = vpop.f32.mrb[0].mxu0
    %439 = vdwg.mxu0
    %v440 = vadd.f32 %v139, %v437
    %v441 = vmul.f32 %v440, 0.5
    %v442 = vtanh.pop %v441
    %v443 = vmul.f32 %v442, 0.5
    %v444 = vadd.f32 %v443, 0.5
    %v445 = vtanh.pop %v440
    %v446 = vmul.f32 %v444, %v358
    %448 = vrot.lane.b32.xlu0 %v445, 64
    %v449 = vpop.permute.xlu0 %448
    %v451 = vmul.f32 %v444, %v449
    %453 = vrot.lane.b32.xlu0 %v451, 32
    %v454 = vpop.permute.xlu0 %453
    %v456 = vadd.f32 %v446, %v454
    %v457 = vtanh.pop %v456
    %459 = vrot.lane.b32.xlu0 %v457, 64
    %v460 = vpop.permute.xlu0 %459
    %v462 = vmul.f32 %v444, %v460
    %464 = vrot.lane.b32.xlu0 %v462, 32
    %v465 = vpop.permute.xlu0 %464
    %v466 = vsel %vm37, %v465, 0
    %468 = vmatprep.subr.mxu0 0.0
    %469 = vmatpush1.msra.mxu0 %v167
    %470 = vmatprep.subr.mxu0 0.0
    %471 = vmatpush1.msra.mxu0 %v168
    %472 = vmatprep.subr.mxu0 0.0
    %473 = vmatpush1.msra.mxu0 %v169
    %474 = vmatprep.subr.mxu0 0.0
    %475 = vmatpush1.msra.mxu0 %v170
    %476 = vmatprep.subr.mxu0 0.0
    %477 = vmatpush1.msra.mxu0 0.0
    %478 = vmatprep.subr.mxu0 0.0
    %479 = vmatpush1.msra.mxu0 0.0
    %480 = vmatprep.subr.mxu0 0.0
    %481 = vmatpush1.msra.mxu0 0.0
    %482 = vmatprep.subr.mxu0 0.0
    %483 = vmatpush1.msra.mxu0 0.0
    %484 = vmatprep.subr.mxu0 0.0
    %485 = vmatpush1.msra.mxu0 0.0
    %486 = vmatprep.subr.mxu0 0.0
    %487 = vmatpush1.msra.mxu0 0.0
    %488 = vmatprep.subr.mxu0 0.0
    %489 = vmatpush1.msra.mxu0 0.0
    %490 = vmatprep.subr.mxu0 0.0
    %491 = vmatpush1.msra.mxu0 0.0
    %492 = vmatprep.subr.mxu0 0.0
    %493 = vmatpush1.msra.mxu0 0.0
    %494 = vmatprep.subr.mxu0 0.0
    %495 = vmatpush1.msra.mxu0 0.0
    %496 = vmatprep.subr.mxu0 0.0
    %497 = vmatpush1.msra.mxu0 0.0
    %498 = vmatprep.subr.mxu0 0.0
    %499 = vmatpush1.msra.mxu0 0.0
    %500 = vmatprep.subr.mxu0 0.0
    %501 = vmatpush1.msra.mxu0 0.0
    %502 = vmatprep.subr.mxu0 0.0
    %503 = vmatpush1.msra.mxu0 0.0
    %504 = vmatprep.subr.mxu0 0.0
    %505 = vmatpush1.msra.mxu0 0.0
    %506 = vmatprep.subr.mxu0 0.0
    %507 = vmatpush1.msra.mxu0 0.0
    %508 = vmatprep.subr.mxu0 0.0
    %509 = vmatpush1.msra.mxu0 0.0
    %510 = vmatprep.subr.mxu0 0.0
    %511 = vmatpush1.msra.mxu0 0.0
    %512 = vmatprep.subr.mxu0 0.0
    %513 = vmatpush1.msra.mxu0 0.0
    %514 = vmatprep.subr.mxu0 0.0
    %515 = vmatpush1.msra.mxu0 0.0
    %516 = vmatprep.subr.mxu0 0.0
    %517 = vmatpush1.msra.mxu0 0.0
    %518 = vmatprep.subr.mxu0 0.0
    %519 = vmatpush1.msra.mxu0 0.0
    %520 = vmatprep.subr.mxu0 0.0
    %521 = vmatpush1.msra.mxu0 0.0
    %522 = vmatprep.subr.mxu0 0.0
    %523 = vmatpush1.msra.mxu0 0.0
    %524 = vmatprep.subr.mxu0 0.0
    %525 = vmatpush1.msra.mxu0 0.0
    %526 = vmatprep.subr.mxu0 0.0
    %527 = vmatpush1.msra.mxu0 0.0
    %528 = vmatprep.subr.mxu0 0.0
    %529 = vmatpush1.msra.mxu0 0.0
    %530 = vmatprep.subr.mxu0 0.0
    %531 = vmatpush1.msra.mxu0 0.0
    %532 = vmatprep.mubr.f32.mxu0 0.0
    %533 = vmatmul.mubr.f32.gmra.mrb[0].mxu0 %v466
    %v534 = vpop.f32.mrb[0].mxu0
    %v535 = vadd.f32 0.0, %v534
    %v536 = vpop.f32.mrb[0].mxu0
    %537 = vdwg.mxu0
    %v538 = vadd.f32 %v144, %v535
    %v539 = vmul.f32 %v538, 0.5
    %v540 = vtanh.pop %v539
    %v541 = vmul.f32 %v540, 0.5
    %v542 = vadd.f32 %v541, 0.5
    %v543 = vtanh.pop %v538
    %v544 = vmul.f32 %v542, %v456
    %546 = vrot.lane.b32.xlu0 %v543, 64
    %v547 = vpop.permute.xlu0 %546
    %v549 = vmul.f32 %v542, %v547
    %551 = vrot.lane.b32.xlu0 %v549, 32
    %v552 = vpop.permute.xlu0 %551
    %v554 = vadd.f32 %v544, %v552
    %v555 = vtanh.pop %v554
    %557 = vrot.lane.b32.xlu0 %v555, 64
    %v558 = vpop.permute.xlu0 %557
    %v560 = vmul.f32 %v542, %v558
    %562 = vrot.lane.b32.xlu0 %v560, 32
    %v563 = vpop.permute.xlu0 %562
    %v564 = vsel %vm37, %v563, 0
    %566 = vmatprep.subr.mxu0 0.0
    %567 = vmatpush1.msra.mxu0 %v167
    %568 = vmatprep.subr.mxu0 0.0
    %569 = vmatpush1.msra.mxu0 %v168
    %570 = vmatprep.subr.mxu0 0.0
    %571 = vmatpush1.msra.mxu0 %v169
    %572 = vmatprep.subr.mxu0 0.0
    %573 = vmatpush1.msra.mxu0 %v170
    %574 = vmatprep.subr.mxu0 0.0
    %575 = vmatpush1.msra.mxu0 0.0
    %576 = vmatprep.subr.mxu0 0.0
    %577 = vmatpush1.msra.mxu0 0.0
    %578 = vmatprep.subr.mxu0 0.0
    %579 = vmatpush1.msra.mxu0 0.0
    %580 = vmatprep.subr.mxu0 0.0
    %581 = vmatpush1.msra.mxu0 0.0
    %582 = vmatprep.subr.mxu0 0.0
    %583 = vmatpush1.msra.mxu0 0.0
    %584 = vmatprep.subr.mxu0 0.0
    %585 = vmatpush1.msra.mxu0 0.0
    %586 = vmatprep.subr.mxu0 0.0
    %587 = vmatpush1.msra.mxu0 0.0
    %588 = vmatprep.subr.mxu0 0.0
    %589 = vmatpush1.msra.mxu0 0.0
    %590 = vmatprep.subr.mxu0 0.0
    %591 = vmatpush1.msra.mxu0 0.0
    %592 = vmatprep.subr.mxu0 0.0
    %593 = vmatpush1.msra.mxu0 0.0
    %594 = vmatprep.subr.mxu0 0.0
    %595 = vmatpush1.msra.mxu0 0.0
    %596 = vmatprep.subr.mxu0 0.0
    %597 = vmatpush1.msra.mxu0 0.0
    %598 = vmatprep.subr.mxu0 0.0
    %599 = vmatpush1.msra.mxu0 0.0
    %600 = vmatprep.subr.mxu0 0.0
    %601 = vmatpush1.msra.mxu0 0.0
    %602 = vmatprep.subr.mxu0 0.0
    %603 = vmatpush1.msra.mxu0 0.0
    %604 = vmatprep.subr.mxu0 0.0
    %605 = vmatpush1.msra.mxu0 0.0
    %606 = vmatprep.subr.mxu0 0.0
    %607 = vmatpush1.msra.mxu0 0.0
    %608 = vmatprep.subr.mxu0 0.0
    %609 = vmatpush1.msra.mxu0 0.0
    %610 = vmatprep.subr.mxu0 0.0
    %611 = vmatpush1.msra.mxu0 0.0
    %612 = vmatprep.subr.mxu0 0.0
    %613 = vmatpush1.msra.mxu0 0.0
    %614 = vmatprep.subr.mxu0 0.0
    %615 = vmatpush1.msra.mxu0 0.0
    %616 = vmatprep.subr.mxu0 0.0
    %617 = vmatpush1.msra.mxu0 0.0
    %618 = vmatprep.subr.mxu0 0.0
    %619 = vmatpush1.msra.mxu0 0.0
    %620 = vmatprep.subr.mxu0 0.0
    %621 = vmatpush1.msra.mxu0 0.0
    %622 = vmatprep.subr.mxu0 0.0
    %623 = vmatpush1.msra.mxu0 0.0
    %624 = vmatprep.subr.mxu0 0.0
    %625 = vmatpush1.msra.mxu0 0.0
    %626 = vmatprep.subr.mxu0 0.0
    %627 = vmatpush1.msra.mxu0 0.0
    %628 = vmatprep.subr.mxu0 0.0
    %629 = vmatpush1.msra.mxu0 0.0
    %630 = vmatprep.mubr.f32.mxu0 0.0
    %631 = vmatmul.mubr.f32.gmra.mrb[0].mxu0 %v564
    %v632 = vpop.f32.mrb[0].mxu0
    %v633 = vadd.f32 0.0, %v632
    %v634 = vpop.f32.mrb[0].mxu0
    %635 = vdwg.mxu0
    %v636 = vadd.f32 %v149, %v633
    %v637 = vmul.f32 %v636, 0.5
    %v638 = vtanh.pop %v637
    %v639 = vmul.f32 %v638, 0.5
    %v640 = vadd.f32 %v639, 0.5
    %v641 = vtanh.pop %v636
    %v642 = vmul.f32 %v640, %v554
    %644 = vrot.lane.b32.xlu0 %v641, 64
    %v645 = vpop.permute.xlu0 %644
    %v647 = vmul.f32 %v640, %v645
    %649 = vrot.lane.b32.xlu0 %v647, 32
    %v650 = vpop.permute.xlu0 %649
    %v652 = vadd.f32 %v642, %v650
    %v653 = vtanh.pop %v652
    %655 = vrot.lane.b32.xlu0 %v653, 64
    %v656 = vpop.permute.xlu0 %655
    %v658 = vmul.f32 %v640, %v656
    %660 = vrot.lane.b32.xlu0 %v658, 32
    %v661 = vpop.permute.xlu0 %660
    %v662 = vsel %vm37, %v661, 0
    %664 = vmatprep.subr.mxu0 0.0
    %665 = vmatpush1.msra.mxu0 %v167
    %666 = vmatprep.subr.mxu0 0.0
    %667 = vmatpush1.msra.mxu0 %v168
    %668 = vmatprep.subr.mxu0 0.0
    %669 = vmatpush1.msra.mxu0 %v169
    %670 = vmatprep.subr.mxu0 0.0
    %671 = vmatpush1.msra.mxu0 %v170
    %672 = vmatprep.subr.mxu0 0.0
    %673 = vmatpush1.msra.mxu0 0.0
    %674 = vmatprep.subr.mxu0 0.0
    %675 = vmatpush1.msra.mxu0 0.0
    %676 = vmatprep.subr.mxu0 0.0
    %677 = vmatpush1.msra.mxu0 0.0
    %678 = vmatprep.subr.mxu0 0.0
    %679 = vmatpush1.msra.mxu0 0.0
    %680 = vmatprep.subr.mxu0 0.0
    %681 = vmatpush1.msra.mxu0 0.0
    %682 = vmatprep.subr.mxu0 0.0
    %683 = vmatpush1.msra.mxu0 0.0
    %684 = vmatprep.subr.mxu0 0.0
    %685 = vmatpush1.msra.mxu0 0.0
    %686 = vmatprep.subr.mxu0 0.0
    %687 = vmatpush1.msra.mxu0 0.0
    %688 = vmatprep.subr.mxu0 0.0
    %689 = vmatpush1.msra.mxu0 0.0
    %690 = vmatprep.subr.mxu0 0.0
    %691 = vmatpush1.msra.mxu0 0.0
    %692 = vmatprep.subr.mxu0 0.0
    %693 = vmatpush1.msra.mxu0 0.0
    %694 = vmatprep.subr.mxu0 0.0
    %695 = vmatpush1.msra.mxu0 0.0
    %696 = vmatprep.subr.mxu0 0.0
    %697 = vmatpush1.msra.mxu0 0.0
    %698 = vmatprep.subr.mxu0 0.0
    %699 = vmatpush1.msra.mxu0 0.0
    %700 = vmatprep.subr.mxu0 0.0
    %701 = vmatpush1.msra.mxu0 0.0
    %702 = vmatprep.subr.mxu0 0.0
    %703 = vmatpush1.msra.mxu0 0.0
    %704 = vmatprep.subr.mxu0 0.0
    %705 = vmatpush1.msra.mxu0 0.0
    %706 = vmatprep.subr.mxu0 0.0
    %707 = vmatpush1.msra.mxu0 0.0
    %708 = vmatprep.subr.mxu0 0.0
    %709 = vmatpush1.msra.mxu0 0.0
    %710 = vmatprep.subr.mxu0 0.0
    %711 = vmatpush1.msra.mxu0 0.0
    %712 = vmatprep.subr.mxu0 0.0
    %713 = vmatpush1.msra.mxu0 0.0
    %714 = vmatprep.subr.mxu0 0.0
    %715 = vmatpush1.msra.mxu0 0.0
    %716 = vmatprep.subr.mxu0 0.0
    %717 = vmatpush1.msra.mxu0 0.0
    %718 = vmatprep.subr.mxu0 0.0
    %719 = vmatpush1.msra.mxu0 0.0
    %720 = vmatprep.subr.mxu0 0.0
    %721 = vmatpush1.msra.mxu0 0.0
    %722 = vmatprep.subr.mxu0 0.0
    %723 = vmatpush1.msra.mxu0 0.0
    %724 = vmatprep.subr.mxu0 0.0
    %725 = vmatpush1.msra.mxu0 0.0
    %726 = vmatprep.subr.mxu0 0.0
    %727 = vmatpush1.msra.mxu0 0.0
    %728 = vmatprep.mubr.f32.mxu0 0.0
    %729 = vmatmul.mubr.f32.gmra.mrb[0].mxu0 %v662
    %v730 = vpop.f32.mrb[0].mxu0
    %v731 = vadd.f32 0.0, %v730
    %v732 = vpop.f32.mrb[0].mxu0
    %733 = vdwg.mxu0
    %v734 = vadd.f32 %v154, %v731
    %v735 = vmul.f32 %v734, 0.5
    %v736 = vtanh.pop %v735
    %v737 = vmul.f32 %v736, 0.5
    %v738 = vadd.f32 %v737, 0.5
    %v739 = vtanh.pop %v734
    %v740 = vmul.f32 %v738, %v652
    %742 = vrot.lane.b32.xlu0 %v739, 64
    %v743 = vpop.permute.xlu0 %742
    %v745 = vmul.f32 %v738, %v743
    %747 = vrot.lane.b32.xlu0 %v745, 32
    %v748 = vpop.permute.xlu0 %747
    %v750 = vadd.f32 %v740, %v748
    %v751 = vtanh.pop %v750
    %753 = vrot.lane.b32.xlu0 %v751, 64
    %v754 = vpop.permute.xlu0 %753
    %v756 = vmul.f32 %v738, %v754
    %758 = vrot.lane.b32.xlu0 %v756, 32
    %v759 = vpop.permute.xlu0 %758
    %v760 = vsel %vm37, %v759, 0
    %762 = vmatprep.subr.mxu0 0.0
    %763 = vmatpush1.msra.mxu0 %v167
    %764 = vmatprep.subr.mxu0 0.0
    %765 = vmatpush1.msra.mxu0 %v168
    %766 = vmatprep.subr.mxu0 0.0
    %767 = vmatpush1.msra.mxu0 %v169
    %768 = vmatprep.subr.mxu0 0.0
    %769 = vmatpush1.msra.mxu0 %v170
    %770 = vmatprep.subr.mxu0 0.0
    %771 = vmatpush1.msra.mxu0 0.0
    %772 = vmatprep.subr.mxu0 0.0
    %773 = vmatpush1.msra.mxu0 0.0
    %774 = vmatprep.subr.mxu0 0.0
    %775 = vmatpush1.msra.mxu0 0.0
    %776 = vmatprep.subr.mxu0 0.0
    %777 = vmatpush1.msra.mxu0 0.0
    %778 = vmatprep.subr.mxu0 0.0
    %779 = vmatpush1.msra.mxu0 0.0
    %780 = vmatprep.subr.mxu0 0.0
    %781 = vmatpush1.msra.mxu0 0.0
    %782 = vmatprep.subr.mxu0 0.0
    %783 = vmatpush1.msra.mxu0 0.0
    %784 = vmatprep.subr.mxu0 0.0
    %785 = vmatpush1.msra.mxu0 0.0
    %786 = vmatprep.subr.mxu0 0.0
    %787 = vmatpush1.msra.mxu0 0.0
    %788 = vmatprep.subr.mxu0 0.0
    %789 = vmatpush1.msra.mxu0 0.0
    %790 = vmatprep.subr.mxu0 0.0
    %791 = vmatpush1.msra.mxu0 0.0
    %792 = vmatprep.subr.mxu0 0.0
    %793 = vmatpush1.msra.mxu0 0.0
    %794 = vmatprep.subr.mxu0 0.0
    %795 = vmatpush1.msra.mxu0 0.0
    %796 = vmatprep.subr.mxu0 0.0
    %797 = vmatpush1.msra.mxu0 0.0
    %798 = vmatprep.subr.mxu0 0.0
    %799 = vmatpush1.msra.mxu0 0.0
    %800 = vmatprep.subr.mxu0 0.0
    %801 = vmatpush1.msra.mxu0 0.0
    %802 = vmatprep.subr.mxu0 0.0
    %803 = vmatpush1.msra.mxu0 0.0
    %804 = vmatprep.subr.mxu0 0.0
    %805 = vmatpush1.msra.mxu0 0.0
    %806 = vmatprep.subr.mxu0 0.0
    %807 = vmatpush1.msra.mxu0 0.0
    %808 = vmatprep.subr.mxu0 0.0
    %809 = vmatpush1.msra.mxu0 0.0
    %810 = vmatprep.subr.mxu0 0.0
    %811 = vmatpush1.msra.mxu0 0.0
    %812 = vmatprep.subr.mxu0 0.0
    %813 = vmatpush1.msra.mxu0 0.0
    %814 = vmatprep.subr.mxu0 0.0
    %815 = vmatpush1.msra.mxu0 0.0
    %816 = vmatprep.subr.mxu0 0.0
    %817 = vmatpush1.msra.mxu0 0.0
    %818 = vmatprep.subr.mxu0 0.0
    %819 = vmatpush1.msra.mxu0 0.0
    %820 = vmatprep.subr.mxu0 0.0
    %821 = vmatpush1.msra.mxu0 0.0
    %822 = vmatprep.subr.mxu0 0.0
    %823 = vmatpush1.msra.mxu0 0.0
    %824 = vmatprep.subr.mxu0 0.0
    %825 = vmatpush1.msra.mxu0 0.0
    %826 = vmatprep.mubr.f32.mxu0 0.0
    %827 = vmatmul.mubr.f32.gmra.mrb[0].mxu0 %v760
    %v828 = vpop.f32.mrb[0].mxu0
    %v829 = vadd.f32 0.0, %v828
    %v830 = vpop.f32.mrb[0].mxu0
    %831 = vdwg.mxu0
    %v832 = vadd.f32 %v159, %v829
    %v833 = vmul.f32 %v832, 0.5
    %v834 = vtanh.pop %v833
    %v835 = vmul.f32 %v834, 0.5
    %v836 = vadd.f32 %v835, 0.5
    %v837 = vtanh.pop %v832
    %v838 = vmul.f32 %v836, %v750
    %840 = vrot.lane.b32.xlu0 %v837, 64
    %v841 = vpop.permute.xlu0 %840
    %v843 = vmul.f32 %v836, %v841
    %845 = vrot.lane.b32.xlu0 %v843, 32
    %v846 = vpop.permute.xlu0 %845
    %v848 = vadd.f32 %v838, %v846
    %v849 = vtanh.pop %v848
    %851 = vrot.lane.b32.xlu0 %v849, 64
    %v852 = vpop.permute.xlu0 %851
    %v854 = vmul.f32 %v836, %v852
    %856 = vrot.lane.b32.xlu0 %v854, 32
    %v857 = vpop.permute.xlu0 %856
    %v858 = vsel %vm37, %v857, 0
    %860 = vmatprep.subr.mxu0 0.0
    %861 = vmatpush1.msra.mxu0 %v167
    %862 = vmatprep.subr.mxu0 0.0
    %863 = vmatpush1.msra.mxu0 %v168
    %864 = vmatprep.subr.mxu0 0.0
    %865 = vmatpush1.msra.mxu0 %v169
    %866 = vmatprep.subr.mxu0 0.0
    %867 = vmatpush1.msra.mxu0 %v170
    %868 = vmatprep.subr.mxu0 0.0
    %869 = vmatpush1.msra.mxu0 0.0
    %870 = vmatprep.subr.mxu0 0.0
    %871 = vmatpush1.msra.mxu0 0.0
    %872 = vmatprep.subr.mxu0 0.0
    %873 = vmatpush1.msra.mxu0 0.0
    %874 = vmatprep.subr.mxu0 0.0
    %875 = vmatpush1.msra.mxu0 0.0
    %876 = vmatprep.subr.mxu0 0.0
    %877 = vmatpush1.msra.mxu0 0.0
    %878 = vmatprep.subr.mxu0 0.0
    %879 = vmatpush1.msra.mxu0 0.0
    %880 = vmatprep.subr.mxu0 0.0
    %881 = vmatpush1.msra.mxu0 0.0
    %882 = vmatprep.subr.mxu0 0.0
    %883 = vmatpush1.msra.mxu0 0.0
    %884 = vmatprep.subr.mxu0 0.0
    %885 = vmatpush1.msra.mxu0 0.0
    %886 = vmatprep.subr.mxu0 0.0
    %887 = vmatpush1.msra.mxu0 0.0
    %888 = vmatprep.subr.mxu0 0.0
    %889 = vmatpush1.msra.mxu0 0.0
    %890 = vmatprep.subr.mxu0 0.0
    %891 = vmatpush1.msra.mxu0 0.0
    %892 = vmatprep.subr.mxu0 0.0
    %893 = vmatpush1.msra.mxu0 0.0
    %894 = vmatprep.subr.mxu0 0.0
    %895 = vmatpush1.msra.mxu0 0.0
    %896 = vmatprep.subr.mxu0 0.0
    %897 = vmatpush1.msra.mxu0 0.0
    %898 = vmatprep.subr.mxu0 0.0
    %899 = vmatpush1.msra.mxu0 0.0
    %900 = vmatprep.subr.mxu0 0.0
    %901 = vmatpush1.msra.mxu0 0.0
    %902 = vmatprep.subr.mxu0 0.0
    %903 = vmatpush1.msra.mxu0 0.0
    %904 = vmatprep.subr.mxu0 0.0
    %905 = vmatpush1.msra.mxu0 0.0
    %906 = vmatprep.subr.mxu0 0.0
    %907 = vmatpush1.msra.mxu0 0.0
    %908 = vmatprep.subr.mxu0 0.0
    %909 = vmatpush1.msra.mxu0 0.0
    %910 = vmatprep.subr.mxu0 0.0
    %911 = vmatpush1.msra.mxu0 0.0
    %912 = vmatprep.subr.mxu0 0.0
    %913 = vmatpush1.msra.mxu0 0.0
    %914 = vmatprep.subr.mxu0 0.0
    %915 = vmatpush1.msra.mxu0 0.0
    %916 = vmatprep.subr.mxu0 0.0
    %917 = vmatpush1.msra.mxu0 0.0
    %918 = vmatprep.subr.mxu0 0.0
    %919 = vmatpush1.msra.mxu0 0.0
    %920 = vmatprep.subr.mxu0 0.0
    %921 = vmatpush1.msra.mxu0 0.0
    %922 = vmatprep.subr.mxu0 0.0
    %923 = vmatpush1.msra.mxu0 0.0
    %924 = vmatprep.mubr.f32.mxu0 0.0
    %925 = vmatmul.mubr.f32.gmra.mrb[0].mxu0 %v858
    %v926 = vpop.f32.mrb[0].mxu0
    %v927 = vadd.f32 0.0, %v926
    %v928 = vpop.f32.mrb[0].mxu0
    %929 = vdwg.mxu0
    %v930 = vadd.f32 %v164, %v927
    %v931 = vmul.f32 %v930, 0.5
    %v932 = vtanh.pop %v931
    %v933 = vmul.f32 %v932, 0.5
    %v934 = vadd.f32 %v933, 0.5
    %v935 = vtanh.pop %v930
    %v936 = vmul.f32 %v934, %v848
    %938 = vrot.lane.b32.xlu0 %v935, 64
    %v939 = vpop.permute.xlu0 %938
    %v941 = vmul.f32 %v934, %v939
    %943 = vrot.lane.b32.xlu0 %v941, 32
    %v944 = vpop.permute.xlu0 %943
    %v946 = vadd.f32 %v936, %v944
    %v947 = vtanh.pop %v946
    %949 = vrot.lane.b32.xlu0 %v947, 64
    %v950 = vpop.permute.xlu0 %949
    %v952 = vmul.f32 %v934, %v950
    %954 = vrot.lane.b32.xlu0 %v952, 32
    %v955 = vpop.permute.xlu0 %954
    %957 = vst.msk [vmem:[#allocation2] sm:$0xff] %vm37, %v955
    // Predicated region
    $region18: #{tpu_custom_call.1} parent=1 // pred_check
      _
    $region19: #{tpu_custom_call.1} parent=1 // pred_check_branch
      %959 = sbr.rel (0) target = $region21
    $region20: #{tpu_custom_call.1} parent=1 // pred_region
      %s961 = ssub.s32 128, 128
      %962 = vsyncadd [#allocation3], %s961
      %s964 = sshll.u32 [#allocation2], 4
      %s965 = int_to_ptr.vmem [resolvable:$true] %s964
      %967 = dma.vmem_to_hbm [thread:$0]  %s965, 128, %s4, [#allocation3]
    $region21: #{tpu_custom_call.1} parent=1 // pred_fallthru
      _
    // Predicated region
    $region22: #{tpu_custom_call.1} parent=1 // pred_check
      _
    $region23: #{tpu_custom_call.1} parent=1 // pred_check_branch
      %969 = sbr.rel (0) target = $region25
    $region24: #{tpu_custom_call.1} parent=1 // pred_region
      %970 = dma.done [#allocation3], 128
    $region25: #{tpu_custom_call.1} parent=1 // pred_fallthru
      _
    %971 = vsyncpa [#allocation3], 1

</llo_original>
